<compile_context>
chip_gen: v6e
topology: v6e:2x2x1
jax: 0.10.0
libtpu: 0.0.40
codegen_flags: <defaults>
</compile_context>

<pallas_src>
import functools

import jax
import jax.numpy as jnp
from jax.experimental import pallas as pl
from jax.experimental.pallas import tpu as pltpu


def _round_up(n, m):
    return ((n + m - 1) // m) * m


# ----------------------------------------------------------------------------
# Fused kernel body (shared by the gridless and the batched/grid paths)
# ----------------------------------------------------------------------------
def _fused_mlp_kernel(*refs, num_layers: int):
    """refs = (x_ref, w1_ref, b1_ref, ..., wN_ref, bN_ref, o_ref).

    Chains all Linear layers inside one kernel body; intermediates never touch
    HBM.  Weights may be stored bf16 (upcast here); all activations, bias adds
    and MXU accumulation are f32.  ReLU on all but the last layer.
    """
    x_ref = refs[0]
    o_ref = refs[-1]
    wb_refs = refs[1:-1]

    h = x_ref[...].astype(jnp.float32)
    for i in range(num_layers):
        w = wb_refs[2 * i][...].astype(jnp.float32)      # bf16 -> f32 upcast (VMEM-resident)
        b = wb_refs[2 * i + 1][...]                      # (1, D_out) f32, broadcasts over batch
        h = jnp.dot(h, w, preferred_element_type=jnp.float32) + b
        if i < num_layers - 1:
            h = jnp.maximum(h, 0.0)                      # ReLU on hidden layers only
    o_ref[...] = h.astype(o_ref.dtype)


# ----------------------------------------------------------------------------
# Wrapper
# ----------------------------------------------------------------------------
def mlp_forward(x, padded_params, out_features, *, batch_block=256):
    """Forward pass of Model in a single fused pallas_call.

    x:             (B, input_size) float32 (unpadded)
    padded_params: output of pad_params_for_kernel (lane-padded, bf16 weights)
    out_features:  true (unpadded) output width of the last layer
    """
    num_layers = len(padded_params)
    d_in_pad = padded_params[0][0].shape[0]
    d_out_pad = padded_params[-1][0].shape[1]

    B, d_in = x.shape
    # One-time lane pad of the input features; exact because the matching
    # rows of the first weight are zero.
    if d_in != d_in_pad:
        x = jnp.pad(x, ((0, 0), (0, d_in_pad - d_in)))

    flat_params = []
    for w, b in padded_params:
        flat_params.append(w)
        flat_params.append(b)

    kernel = functools.partial(_fused_mlp_kernel, num_layers=num_layers)

    flops = 2 * B * sum(int(w.shape[0]) * int(w.shape[1]) for w, _ in padded_params)
    param_bytes = sum(int(a.size) * a.dtype.itemsize for a in flat_params)

    if B <= batch_block:
        # Gridless: whole arrays resident in VMEM, no pipeline machinery.
        bytes_accessed = param_bytes + int(x.size) * 4 + B * d_out_pad * 4
        out = pl.pallas_call(
            kernel,
            out_shape=jax.ShapeDtypeStruct((B, d_out_pad), jnp.float32),
            in_specs=[pl.BlockSpec(memory_space=pltpu.MemorySpace.VMEM)]
            * (1 + len(flat_params)),
            out_specs=pl.BlockSpec(memory_space=pltpu.MemorySpace.VMEM),
            cost_estimate=pl.CostEstimate(
                flops=int(flops), transcendentals=0, bytes_accessed=int(bytes_accessed)
            ),
        )(x, *flat_params)
        return out[:, :out_features]

    # Batched path: 1-D grid over batch blocks; weights/biases stay resident
    # (index_map -> (0, 0) every step => single DMA), batch axis "parallel"
    # so megacore chips (v7x) shard the blocks across both TensorCores.
    Bp = _round_up(B, batch_block)
    if Bp != B:
        x = jnp.pad(x, ((0, Bp - B), (0, 0)))
    n_blk = Bp // batch_block

    in_specs = [pl.BlockSpec((batch_block, d_in_pad), lambda i: (i, 0))]
    for w, b in padded_params:
        in_specs.append(pl.BlockSpec(w.shape, lambda i: (0, 0)))
        in_specs.append(pl.BlockSpec(b.shape, lambda i: (0, 0)))

    bytes_accessed = param_bytes + (Bp * d_in_pad + Bp * d_out_pad) * 4
    out = pl.pallas_call(
        kernel,
        out_shape=jax.ShapeDtypeStruct((Bp, d_out_pad), jnp.float32),
        grid=(n_blk,),
        in_specs=in_specs,
        out_specs=pl.BlockSpec((batch_block, d_out_pad), lambda i: (i, 0)),
        compiler_params=pltpu.CompilerParams(
            dimension_semantics=("parallel",),
            vmem_limit_bytes=32 << 20,
        ),
        cost_estimate=pl.CostEstimate(
            flops=int(flops), transcendentals=0, bytes_accessed=int(bytes_accessed)
        ),
    )(x, *flat_params)
    return out[:B, :out_features]


# ----------------------------------------------------------------------------
# Parameter init (mirrors nn.Linear default init) and lane-padding prep
# ----------------------------------------------------------------------------
def init_mlp_params(key, input_size, layers):
    """Deterministic init mirroring nn.Linear default (U[-1/sqrt(fan_in), +])."""
    params = []
    fan_in = input_size
    for out_size in layers:
        key, kw, kb = jax.random.split(key, 3)
        bound = 1.0 / jnp.sqrt(jnp.float32(fan_in))
        # Stored as (in, out) == PyTorch weight.T
        w = jax.random.uniform(kw, (fan_in, out_size), jnp.float32, -bound, bound)
        b = jax.random.uniform(kb, (out_size,), jnp.float32, -bound, bound)
        params.append((w, b))
        fan_in = out_size
    return params


def pad_params_for_kernel(params, *, weight_dtype=jnp.bfloat16):
    """Zero-pad every in/out width up to a multiple of 128 lanes (exact math).

    All weight in-dims and out-dims (including the final layer's) are padded
    with zeros so every kernel tile is lane-dense.  Weights are stored in
    `weight_dtype` (bf16 by default, halving weight DMA bytes); biases are
    kept f32 and reshaped to (1, D_out) for broadcast.
    """
    padded = []
    prev_pad = _round_up(params[0][0].shape[0], 128) - params[0][0].shape[0]
    for w, b in params:
        if prev_pad:
            w = jnp.pad(w, ((0, prev_pad), (0, 0)))
        d_out = w.shape[1]
        pad_out = _round_up(d_out, 128) - d_out
        if pad_out:
            w = jnp.pad(w, ((0, 0), (0, pad_out)))
            b = jnp.pad(b, (0, pad_out))
        prev_pad = pad_out
        padded.append((w.astype(weight_dtype), b.reshape(1, -1).astype(jnp.float32)))
    return padded


# ----------------------------------------------------------------------------
# Pure-JAX reference (unpadded params; weights rounded through bf16 to match
# the kernel's weight storage — everything else f32).
# ----------------------------------------------------------------------------
def mlp_forward_ref(x, params, weight_dtype=jnp.bfloat16):
    n = len(params)
    h = x
    for idx, (w, b) in enumerate(params):
        w_eff = w.astype(weight_dtype).astype(jnp.float32)
        h = jnp.dot(h, w_eff) + b
        if idx < n - 1:
            h = jnp.maximum(h, 0.0)
    return h


if __name__ == "__main__":
    key = jax.random.PRNGKey(0)
    key, kx1, kx2, kp = jax.random.split(key, 4)

    # Model(input_size=32, layers=[64, 48, 10])
    input_size = 32
    layers = [64, 48, 10]

    params = init_mlp_params(kp, input_size, layers)
    padded_params = pad_params_for_kernel(params)     # one-time prep, outside hot path

    # 1) Small batch: gridless whole-array-in-VMEM path.
    x_small = jax.random.normal(kx1, (8, input_size), jnp.float32)
    out_small = jax.block_until_ready(mlp_forward(x_small, padded_params, layers[-1]))
    ref_small = mlp_forward_ref(x_small, params)
    assert out_small.shape == (8, layers[-1]), out_small.shape
    assert jnp.allclose(out_small, ref_small, atol=1e-4, rtol=1e-4), "small-batch mismatch"

    # 2) Larger batch: grid over 256-row blocks, weights resident, "parallel" axis.
    x_big = jax.random.normal(kx2, (512, input_size), jnp.float32)
    out_big = jax.block_until_ready(mlp_forward(x_big, padded_params, layers[-1]))
    ref_big = mlp_forward_ref(x_big, params)
    assert out_big.shape == (512, layers[-1]), out_big.shape
    assert jnp.allclose(out_big, ref_big, atol=1e-4, rtol=1e-4), "batched mismatch"

    print("KERNEL_OK")
</pallas_src>

<mosaic_0001>
module attributes {stable_mosaic.version = 11 : i64} {
  func.func @_fused_mlp_kernel(%arg0: memref<8x128xf32, #tpu.memory_space<vmem>>, %arg1: memref<128x128xbf16, #tpu.memory_space<vmem>>, %arg2: memref<1x128xf32, #tpu.memory_space<vmem>>, %arg3: memref<128x128xbf16, #tpu.memory_space<vmem>>, %arg4: memref<1x128xf32, #tpu.memory_space<vmem>>, %arg5: memref<128x128xbf16, #tpu.memory_space<vmem>>, %arg6: memref<1x128xf32, #tpu.memory_space<vmem>>, %arg7: memref<8x128xf32, #tpu.memory_space<vmem>>) attributes {dimension_semantics = [], scalar_prefetch = 0 : i64, scratch_operands = 0 : i64, tpu.core_type = #tpu.core_type<tc>} {
    %c0 = arith.constant 0 : index
    %c0_0 = arith.constant 0 : index
    %0 = vector.load %arg0[%c0, %c0_0] : memref<8x128xf32, #tpu.memory_space<vmem>>, vector<8x128xf32>
    %c0_1 = arith.constant 0 : index
    %c0_2 = arith.constant 0 : index
    %1 = vector.load %arg1[%c0_1, %c0_2] : memref<128x128xbf16, #tpu.memory_space<vmem>>, vector<128x128xbf16>
    %2 = arith.extf %1 : vector<128x128xbf16> to vector<128x128xf32>
    %c0_3 = arith.constant 0 : index
    %c0_4 = arith.constant 0 : index
    %3 = vector.load %arg2[%c0_3, %c0_4] : memref<1x128xf32, #tpu.memory_space<vmem>>, vector<1x128xf32>
    %cst = arith.constant dense<0.000000e+00> : vector<8x128xf32>
    %4 = tpu.matmul %0, %2, %cst {dimension_numbers = #tpu.dot_dimension_numbers<[1], [0], [0], [1], [0, 0, 1, 1], [], []>} : vector<8x128xf32>, vector<128x128xf32>, vector<8x128xf32> -> vector<8x128xf32>
    %5 = vector.broadcast %3 : vector<1x128xf32> to vector<8x128xf32>
    %6 = arith.addf %4, %5 : vector<8x128xf32>
    %cst_5 = arith.constant 0.000000e+00 : f32
    %7 = vector.broadcast %cst_5 : f32 to vector<8x128xf32>
    %8 = arith.maximumf %6, %7 : vector<8x128xf32>
    %c0_6 = arith.constant 0 : index
    %c0_7 = arith.constant 0 : index
    %9 = vector.load %arg3[%c0_6, %c0_7] : memref<128x128xbf16, #tpu.memory_space<vmem>>, vector<128x128xbf16>
    %10 = arith.extf %9 : vector<128x128xbf16> to vector<128x128xf32>
    %c0_8 = arith.constant 0 : index
    %c0_9 = arith.constant 0 : index
    %11 = vector.load %arg4[%c0_8, %c0_9] : memref<1x128xf32, #tpu.memory_space<vmem>>, vector<1x128xf32>
    %cst_10 = arith.constant dense<0.000000e+00> : vector<8x128xf32>
    %12 = tpu.matmul %8, %10, %cst_10 {dimension_numbers = #tpu.dot_dimension_numbers<[1], [0], [0], [1], [0, 0, 1, 1], [], []>} : vector<8x128xf32>, vector<128x128xf32>, vector<8x128xf32> -> vector<8x128xf32>
    %13 = vector.broadcast %11 : vector<1x128xf32> to vector<8x128xf32>
    %14 = arith.addf %12, %13 : vector<8x128xf32>
    %cst_11 = arith.constant 0.000000e+00 : f32
    %15 = vector.broadcast %cst_11 : f32 to vector<8x128xf32>
    %16 = arith.maximumf %14, %15 : vector<8x128xf32>
    %c0_12 = arith.constant 0 : index
    %c0_13 = arith.constant 0 : index
    %17 = vector.load %arg5[%c0_12, %c0_13] : memref<128x128xbf16, #tpu.memory_space<vmem>>, vector<128x128xbf16>
    %18 = arith.extf %17 : vector<128x128xbf16> to vector<128x128xf32>
    %c0_14 = arith.constant 0 : index
    %c0_15 = arith.constant 0 : index
    %19 = vector.load %arg6[%c0_14, %c0_15] : memref<1x128xf32, #tpu.memory_space<vmem>>, vector<1x128xf32>
    %cst_16 = arith.constant dense<0.000000e+00> : vector<8x128xf32>
    %20 = tpu.matmul %16, %18, %cst_16 {dimension_numbers = #tpu.dot_dimension_numbers<[1], [0], [0], [1], [0, 0, 1, 1], [], []>} : vector<8x128xf32>, vector<128x128xf32>, vector<8x128xf32> -> vector<8x128xf32>
    %21 = vector.broadcast %19 : vector<1x128xf32> to vector<8x128xf32>
    %22 = arith.addf %20, %21 : vector<8x128xf32>
    %c0_17 = arith.constant 0 : index
    %c0_18 = arith.constant 0 : index
    %23 = vector.load %arg7[%c0_17, %c0_18] : memref<8x128xf32, #tpu.memory_space<vmem>>, vector<8x128xf32>
    tpu.vector_store %arg7[%c0_17, %c0_18], %22 {strides = array<i32>} : memref<8x128xf32, #tpu.memory_space<vmem>>, vector<8x128xf32>,
    return
  }
}

</mosaic_0001>

<llo_original>
// kernel: tpu_custom_call.1
$region0: #{tpu_custom_call.1}
  #allocation0 [shape = 'u32[]', space=smem, size = 0x4, offset = 0x4, fixed_abs, tag = 'smem constant byte address 0x4 - core index']
  #allocation1 [shape = 'u32[144,128]{1,0:T(1,128)}', space=vmem, size = 0x12000, scoped, tag = 'internal scratch']
  %s0 = inlined_call_operand.hbm [shape: f32[8,128], index: 0, kind: input, shape index: {}]
  %s1 = inlined_call_operand.hbm [shape: bf16[128,128], index: 1, kind: input, shape index: {}]
  %s2 = inlined_call_operand.vmem [shape: f32[1,128], index: 2, kind: input, shape index: {}]
  %s3 = inlined_call_operand.hbm [shape: bf16[128,128], index: 3, kind: input, shape index: {}]
  %s4 = inlined_call_operand.vmem [shape: f32[1,128], index: 4, kind: input, shape index: {}]
  %s5 = inlined_call_operand.hbm [shape: bf16[128,128], index: 5, kind: input, shape index: {}]
  %s6 = inlined_call_operand.vmem [shape: f32[1,128], index: 6, kind: input, shape index: {}]
  %s7 = inlined_call_operand.hbm [shape: f32[8,128], index: 7, kind: output, shape index: {}]
  %s8 = sld [smem:[#allocation0]]
  $region54: #{tpu_custom_call.1} parent=0
    _
  %s10 = ssub.s32 1, %s8
  %s11 = scalar_select 0, %s10, %s8
  $region1: #{tpu_custom_call.1} parent=0
    #allocation2 [shape = 'u8[4096]{0}', space=vmem, size = 0x1000, scoped, tag = 'input window, operand 0, single buffered']
    #allocation3 [shape = 's32[1]{0}', space=sflag, size = 0x4, scoped, tag = 'scoped memory for tpu_custom_call.1']
    #allocation4 [shape = 's32[1]{0}', space=sflag, size = 0x4, scoped, tag = 'scoped memory for tpu_custom_call.1']
    #allocation5 [shape = 'u8[32768]{0}', space=vmem, size = 0x8000, scoped, tag = 'input window, operand 1, single buffered']
    #allocation6 [shape = 's32[1]{0}', space=sflag, size = 0x4, scoped, tag = 'scoped memory for tpu_custom_call.1']
    #allocation7 [shape = 'u8[32768]{0}', space=vmem, size = 0x8000, scoped, tag = 'input window, operand 3, single buffered']
    #allocation8 [shape = 'u8[32768]{0}', space=vmem, size = 0x8000, scoped, tag = 'input window, operand 5, single buffered']
    #allocation9 [shape = 's32[1]{0}', space=sflag, size = 0x4, scoped, tag = 'scoped memory for tpu_custom_call.1']
    #allocation10 [shape = 'u8[4096]{0}', space=vmem, size = 0x1000, scoped, tag = 'output window, operand 0, single buffered']
    %12 = vsyncpa [#allocation3], 0
    %13 = vsyncpa [#allocation6], 0
    %14 = vsyncpa [#allocation9], 0
    %15 = vsyncpa [#allocation4], 0
    // Predicated region
    $region2: #{tpu_custom_call.1} parent=1 // pred_check
      _
    $region3: #{tpu_custom_call.1} parent=1 // pred_check_branch
      %17 = sbr.rel (0) target = $region5
    $region4: #{tpu_custom_call.1} parent=1 // pred_region
      %s19 = ssub.s32 128, 128
      %20 = vsyncadd [#allocation3], %s19
      %s22 = sshll.u32 [#allocation2], 4
      %s23 = int_to_ptr.vmem [resolvable:$true] %s22
      %25 = dma.hbm_to_vmem [thread:$0]  %s0, 128, %s23, [#allocation3]
    $region5: #{tpu_custom_call.1} parent=1 // pred_fallthru
      _
    // Predicated region
    $region6: #{tpu_custom_call.1} parent=1 // pred_check
      _
    $region7: #{tpu_custom_call.1} parent=1 // pred_check_branch
      %27 = sbr.rel (0) target = $region9
    $region8: #{tpu_custom_call.1} parent=1 // pred_region
      %s29 = ssub.s32 1024, 1024
      %30 = vsyncadd [#allocation6], %s29
      %s31 = sshll.u32 [#allocation5], 4
      %s32 = int_to_ptr.vmem [resolvable:$true] %s31
      %37 = dma.hbm_to_vmem [thread:$0]  %s1, 1024, %s32, [#allocation6], 64, 64, 4
    $region9: #{tpu_custom_call.1} parent=1 // pred_fallthru
      _
    // Predicated region
    $region10: #{tpu_custom_call.1} parent=1 // pred_check
      _
    $region11: #{tpu_custom_call.1} parent=1 // pred_check_branch
      %39 = sbr.rel (0) target = $region13
    $region12: #{tpu_custom_call.1} parent=1 // pred_region
      _
    $region13: #{tpu_custom_call.1} parent=1 // pred_fallthru
      _
    // Predicated region
    $region14: #{tpu_custom_call.1} parent=1 // pred_check
      _
    $region15: #{tpu_custom_call.1} parent=1 // pred_check_branch
      %41 = sbr.rel (0) target = $region17
    $region16: #{tpu_custom_call.1} parent=1 // pred_region
      %s43 = ssub.s32 1024, 1024
      %44 = vsyncadd [#allocation6], %s43
      %s45 = sshll.u32 [#allocation7], 4
      %s46 = int_to_ptr.vmem [resolvable:$true] %s45
      %51 = dma.hbm_to_vmem [thread:$0]  %s3, 1024, %s46, [#allocation6], 64, 64, 4
    $region17: #{tpu_custom_call.1} parent=1 // pred_fallthru
      _
    // Predicated region
    $region18: #{tpu_custom_call.1} parent=1 // pred_check
      _
    $region19: #{tpu_custom_call.1} parent=1 // pred_check_branch
      %53 = sbr.rel (0) target = $region21
    $region20: #{tpu_custom_call.1} parent=1 // pred_region
      _
    $region21: #{tpu_custom_call.1} parent=1 // pred_fallthru
      _
    // Predicated region
    $region22: #{tpu_custom_call.1} parent=1 // pred_check
      _
    $region23: #{tpu_custom_call.1} parent=1 // pred_check_branch
      %55 = sbr.rel (0) target = $region25
    $region24: #{tpu_custom_call.1} parent=1 // pred_region
      %s57 = ssub.s32 1024, 1024
      %58 = vsyncadd [#allocation9], %s57
      %s59 = sshll.u32 [#allocation8], 4
      %s60 = int_to_ptr.vmem [resolvable:$true] %s59
      %65 = dma.hbm_to_vmem [thread:$0]  %s5, 1024, %s60, [#allocation9], 64, 64, 4
    $region25: #{tpu_custom_call.1} parent=1 // pred_fallthru
      _
    // Predicated region
    $region26: #{tpu_custom_call.1} parent=1 // pred_check
      _
    $region27: #{tpu_custom_call.1} parent=1 // pred_check_branch
      %67 = sbr.rel (0) target = $region29
    $region28: #{tpu_custom_call.1} parent=1 // pred_region
      _
    $region29: #{tpu_custom_call.1} parent=1 // pred_fallthru
      _
    // Predicated region
    $region30: #{tpu_custom_call.1} parent=1 // pred_check
      _
    $region31: #{tpu_custom_call.1} parent=1 // pred_check_branch
      %69 = sbr.rel (0) target = $region33
    $region32: #{tpu_custom_call.1} parent=1 // pred_region
      %70 = dma.done [#allocation3], 128
    $region33: #{tpu_custom_call.1} parent=1 // pred_fallthru
      _
    // Predicated region
    $region34: #{tpu_custom_call.1} parent=1 // pred_check
      _
    $region35: #{tpu_custom_call.1} parent=1 // pred_check_branch
      %72 = sbr.rel (0) target = $region37
    $region36: #{tpu_custom_call.1} parent=1 // pred_region
      %73 = dma.done [#allocation6], 1024
    $region37: #{tpu_custom_call.1} parent=1 // pred_fallthru
      _
    // Predicated region
    $region38: #{tpu_custom_call.1} parent=1 // pred_check
      _
    $region39: #{tpu_custom_call.1} parent=1 // pred_check_branch
      %75 = sbr.rel (0) target = $region41
    $region40: #{tpu_custom_call.1} parent=1 // pred_region
      %76 = dma.done [#allocation6], 1024
    $region41: #{tpu_custom_call.1} parent=1 // pred_fallthru
      _
    // Predicated region
    $region42: #{tpu_custom_call.1} parent=1 // pred_check
      _
    $region43: #{tpu_custom_call.1} parent=1 // pred_check_branch
      %78 = sbr.rel (0) target = $region45
    $region44: #{tpu_custom_call.1} parent=1 // pred_region
      %79 = dma.done [#allocation9], 1024
    $region45: #{tpu_custom_call.1} parent=1 // pred_fallthru
      _
    %v80 = vld [vmem:[#allocation2] sm:$0xff]
    %v81 = vld [vmem:[#allocation5] sm:$0xf]
    %v82 = vld [vmem:[#allocation5 + $0x4] sm:$0xf]
    %v83 = vld [vmem:[#allocation5 + $0x8] sm:$0xf]
    %v84 = vld [vmem:[#allocation5 + $0xc] sm:$0xf]
    %v85 = vld [vmem:[#allocation5 + $0x10] sm:$0xf]
    %v86 = vld [vmem:[#allocation5 + $0x14] sm:$0xf]
    %v87 = vld [vmem:[#allocation5 + $0x18] sm:$0xf]
    %v88 = vld [vmem:[#allocation5 + $0x1c] sm:$0xf]
    %v89 = vld [vmem:[#allocation5 + $0x20] sm:$0xf]
    %v90 = vld [vmem:[#allocation5 + $0x24] sm:$0xf]
    %v91 = vld [vmem:[#allocation5 + $0x28] sm:$0xf]
    %v92 = vld [vmem:[#allocation5 + $0x2c] sm:$0xf]
    %v93 = vld [vmem:[#allocation5 + $0x30] sm:$0xf]
    %v94 = vld [vmem:[#allocation5 + $0x34] sm:$0xf]
    %v95 = vld [vmem:[#allocation5 + $0x38] sm:$0xf]
    %v96 = vld [vmem:[#allocation5 + $0x3c] sm:$0xf]
    %v97 = vunpack.c.l.bf16 %v81
    %v98 = vunpack.c.l.bf16 %v82
    %v99 = vunpack.c.l.bf16 %v83
    %v100 = vunpack.c.l.bf16 %v84
    %v101 = vunpack.c.l.bf16 %v85
    %v102 = vunpack.c.l.bf16 %v86
    %v103 = vunpack.c.l.bf16 %v87
    %v104 = vunpack.c.l.bf16 %v88
    %v105 = vunpack.c.l.bf16 %v89
    %v106 = vunpack.c.l.bf16 %v90
    %v107 = vunpack.c.l.bf16 %v91
    %v108 = vunpack.c.l.bf16 %v92
    %v109 = vunpack.c.l.bf16 %v93
    %v110 = vunpack.c.l.bf16 %v94
    %v111 = vunpack.c.l.bf16 %v95
    %v112 = vunpack.c.l.bf16 %v96
    %v113 = vld [vmem:[%s2] sm:$0x1]
    %v115 = vlaneseq
    %v116 = vshrl.u32 %v115, 7
    %v117 = vsub.s32 0, %v116
    %v118 = vrot.slane %v113, %v117
    %120 = vmatprep.subr.mxu0 0.0
    %121 = vmatpush1.msra.mxu0 %v112
    %122 = vmatprep.subr.mxu0 0.0
    %123 = vmatpush1.msra.mxu0 %v111
    %124 = vmatprep.subr.mxu0 0.0
    %125 = vmatpush1.msra.mxu0 %v110
    %126 = vmatprep.subr.mxu0 0.0
    %127 = vmatpush1.msra.mxu0 %v109
    %128 = vmatprep.subr.mxu0 0.0
    %129 = vmatpush1.msra.mxu0 %v108
    %130 = vmatprep.subr.mxu0 0.0
    %131 = vmatpush1.msra.mxu0 %v107
    %132 = vmatprep.subr.mxu0 0.0
    %133 = vmatpush1.msra.mxu0 %v106
    %134 = vmatprep.subr.mxu0 0.0
    %135 = vmatpush1.msra.mxu0 %v105
    %136 = vmatprep.subr.mxu0 0.0
    %137 = vmatpush1.msra.mxu0 %v104
    %138 = vmatprep.subr.mxu0 0.0
    %139 = vmatpush1.msra.mxu0 %v103
    %140 = vmatprep.subr.mxu0 0.0
    %141 = vmatpush1.msra.mxu0 %v102
    %142 = vmatprep.subr.mxu0 0.0
    %143 = vmatpush1.msra.mxu0 %v101
    %144 = vmatprep.subr.mxu0 0.0
    %145 = vmatpush1.msra.mxu0 %v100
    %146 = vmatprep.subr.mxu0 0.0
    %147 = vmatpush1.msra.mxu0 %v99
    %148 = vmatprep.subr.mxu0 0.0
    %149 = vmatpush1.msra.mxu0 %v98
    %150 = vmatprep.subr.mxu0 0.0
    %151 = vmatpush1.msra.mxu0 %v97
    %152 = vmatprep.subr.mxu0 0.0
    %153 = vmatpush2.msra.mxu0 0.0
    %154 = vmatprep.subr.mxu0 0.0
    %155 = vmatpush2.msra.mxu0 0.0
    %156 = vmatprep.subr.mxu0 0.0
    %157 = vmatpush2.msra.mxu0 0.0
    %158 = vmatprep.subr.mxu0 0.0
    %159 = vmatpush2.msra.mxu0 0.0
    %160 = vmatprep.subr.mxu0 0.0
    %161 = vmatpush2.msra.mxu0 0.0
    %162 = vmatprep.subr.mxu0 0.0
    %163 = vmatpush2.msra.mxu0 0.0
    %164 = vmatprep.subr.mxu0 0.0
    %165 = vmatpush2.msra.mxu0 0.0
    %166 = vmatprep.subr.mxu0 0.0
    %167 = vmatpush2.msra.mxu0 0.0
    %168 = vmatprep.subr.mxu0 0.0
    %169 = vmatpush2.msra.mxu0 0.0
    %170 = vmatprep.subr.mxu0 0.0
    %171 = vmatpush2.msra.mxu0 0.0
    %172 = vmatprep.subr.mxu0 0.0
    %173 = vmatpush2.msra.mxu0 0.0
    %174 = vmatprep.subr.mxu0 0.0
    %175 = vmatpush2.msra.mxu0 0.0
    %176 = vmatprep.subr.mxu0 0.0
    %177 = vmatpush2.msra.mxu0 0.0
    %178 = vmatprep.subr.mxu0 0.0
    %179 = vmatpush2.msra.mxu0 0.0
    %180 = vmatprep.subr.mxu0 0.0
    %181 = vmatpush2.msra.mxu0 0.0
    %182 = vmatprep.subr.mxu0 0.0
    %183 = vmatpush2.msra.mxu0 0.0
    %184 = vmatprep.mubr.f32.mxu0 0.0
    %185 = vmatmul.mubr.f32.gmra.mxu0 %v80
    %v186 = vpop.f32.mrf.mxu0
    %v187 = vadd.f32 %v118, %v186
    %v188 = vpop.f32.mrf.mxu0
    %189 = vdwg.mxu0
    %v190 = vmax.f32 %v187, 0.0
    %v191 = vld [vmem:[#allocation7] sm:$0xf]
    %v192 = vld [vmem:[#allocation7 + $0x4] sm:$0xf]
    %v193 = vld [vmem:[#allocation7 + $0x8] sm:$0xf]
    %v194 = vld [vmem:[#allocation7 + $0xc] sm:$0xf]
    %v195 = vld [vmem:[#allocation7 + $0x10] sm:$0xf]
    %v196 = vld [vmem:[#allocation7 + $0x14] sm:$0xf]
    %v197 = vld [vmem:[#allocation7 + $0x18] sm:$0xf]
    %v198 = vld [vmem:[#allocation7 + $0x1c] sm:$0xf]
    %v199 = vld [vmem:[#allocation7 + $0x20] sm:$0xf]
    %v200 = vld [vmem:[#allocation7 + $0x24] sm:$0xf]
    %v201 = vld [vmem:[#allocation7 + $0x28] sm:$0xf]
    %v202 = vld [vmem:[#allocation7 + $0x2c] sm:$0xf]
    %v203 = vld [vmem:[#allocation7 + $0x30] sm:$0xf]
    %v204 = vld [vmem:[#allocation7 + $0x34] sm:$0xf]
    %v205 = vld [vmem:[#allocation7 + $0x38] sm:$0xf]
    %v206 = vld [vmem:[#allocation7 + $0x3c] sm:$0xf]
    %v207 = vunpack.c.l.bf16 %v191
    %v208 = vunpack.c.l.bf16 %v192
    %v209 = vunpack.c.l.bf16 %v193
    %v210 = vunpack.c.l.bf16 %v194
    %v211 = vunpack.c.l.bf16 %v195
    %v212 = vunpack.c.l.bf16 %v196
    %v213 = vunpack.c.l.bf16 %v197
    %v214 = vunpack.c.l.bf16 %v198
    %v215 = vunpack.c.l.bf16 %v199
    %v216 = vunpack.c.l.bf16 %v200
    %v217 = vunpack.c.l.bf16 %v201
    %v218 = vunpack.c.l.bf16 %v202
    %v219 = vunpack.c.l.bf16 %v203
    %v220 = vunpack.c.l.bf16 %v204
    %v221 = vunpack.c.l.bf16 %v205
    %v222 = vunpack.c.l.bf16 %v206
    %v223 = vld [vmem:[%s4] sm:$0x1]
    %v225 = vlaneseq
    %v226 = vshrl.u32 %v225, 7
    %v227 = vsub.s32 0, %v226
    %v228 = vrot.slane %v223, %v227
    %230 = vmatprep.subr.mxu0 0.0
    %231 = vmatpush1.msra.mxu0 %v222
    %232 = vmatprep.subr.mxu0 0.0
    %233 = vmatpush1.msra.mxu0 %v221
    %234 = vmatprep.subr.mxu0 0.0
    %235 = vmatpush1.msra.mxu0 %v220
    %236 = vmatprep.subr.mxu0 0.0
    %237 = vmatpush1.msra.mxu0 %v219
    %238 = vmatprep.subr.mxu0 0.0
    %239 = vmatpush1.msra.mxu0 %v218
    %240 = vmatprep.subr.mxu0 0.0
    %241 = vmatpush1.msra.mxu0 %v217
    %242 = vmatprep.subr.mxu0 0.0
    %243 = vmatpush1.msra.mxu0 %v216
    %244 = vmatprep.subr.mxu0 0.0
    %245 = vmatpush1.msra.mxu0 %v215
    %246 = vmatprep.subr.mxu0 0.0
    %247 = vmatpush1.msra.mxu0 %v214
    %248 = vmatprep.subr.mxu0 0.0
    %249 = vmatpush1.msra.mxu0 %v213
    %250 = vmatprep.subr.mxu0 0.0
    %251 = vmatpush1.msra.mxu0 %v212
    %252 = vmatprep.subr.mxu0 0.0
    %253 = vmatpush1.msra.mxu0 %v211
    %254 = vmatprep.subr.mxu0 0.0
    %255 = vmatpush1.msra.mxu0 %v210
    %256 = vmatprep.subr.mxu0 0.0
    %257 = vmatpush1.msra.mxu0 %v209
    %258 = vmatprep.subr.mxu0 0.0
    %259 = vmatpush1.msra.mxu0 %v208
    %260 = vmatprep.subr.mxu0 0.0
    %261 = vmatpush1.msra.mxu0 %v207
    %262 = vmatprep.subr.mxu0 0.0
    %263 = vmatpush2.msra.mxu0 0.0
    %264 = vmatprep.subr.mxu0 0.0
    %265 = vmatpush2.msra.mxu0 0.0
    %266 = vmatprep.subr.mxu0 0.0
    %267 = vmatpush2.msra.mxu0 0.0
    %268 = vmatprep.subr.mxu0 0.0
    %269 = vmatpush2.msra.mxu0 0.0
    %270 = vmatprep.subr.mxu0 0.0
    %271 = vmatpush2.msra.mxu0 0.0
    %272 = vmatprep.subr.mxu0 0.0
    %273 = vmatpush2.msra.mxu0 0.0
    %274 = vmatprep.subr.mxu0 0.0
    %275 = vmatpush2.msra.mxu0 0.0
    %276 = vmatprep.subr.mxu0 0.0
    %277 = vmatpush2.msra.mxu0 0.0
    %278 = vmatprep.subr.mxu0 0.0
    %279 = vmatpush2.msra.mxu0 0.0
    %280 = vmatprep.subr.mxu0 0.0
    %281 = vmatpush2.msra.mxu0 0.0
    %282 = vmatprep.subr.mxu0 0.0
    %283 = vmatpush2.msra.mxu0 0.0
    %284 = vmatprep.subr.mxu0 0.0
    %285 = vmatpush2.msra.mxu0 0.0
    %286 = vmatprep.subr.mxu0 0.0
    %287 = vmatpush2.msra.mxu0 0.0
    %288 = vmatprep.subr.mxu0 0.0
    %289 = vmatpush2.msra.mxu0 0.0
    %290 = vmatprep.subr.mxu0 0.0
    %291 = vmatpush2.msra.mxu0 0.0
    %292 = vmatprep.subr.mxu0 0.0
    %293 = vmatpush2.msra.mxu0 0.0
    %294 = vmatprep.mubr.f32.mxu0 0.0
    %295 = vmatmul.mubr.f32.gmra.mxu0 %v190
    %v296 = vpop.f32.mrf.mxu0
    %v297 = vadd.f32 %v228, %v296
    %v298 = vpop.f32.mrf.mxu0
    %299 = vdwg.mxu0
    %v300 = vmax.f32 %v297, 0.0
    %v301 = vld [vmem:[#allocation8] sm:$0xf]
    %v302 = vld [vmem:[#allocation8 + $0x4] sm:$0xf]
    %v303 = vld [vmem:[#allocation8 + $0x8] sm:$0xf]
    %v304 = vld [vmem:[#allocation8 + $0xc] sm:$0xf]
    %v305 = vld [vmem:[#allocation8 + $0x10] sm:$0xf]
    %v306 = vld [vmem:[#allocation8 + $0x14] sm:$0xf]
    %v307 = vld [vmem:[#allocation8 + $0x18] sm:$0xf]
    %v308 = vld [vmem:[#allocation8 + $0x1c] sm:$0xf]
    %v309 = vld [vmem:[#allocation8 + $0x20] sm:$0xf]
    %v310 = vld [vmem:[#allocation8 + $0x24] sm:$0xf]
    %v311 = vld [vmem:[#allocation8 + $0x28] sm:$0xf]
    %v312 = vld [vmem:[#allocation8 + $0x2c] sm:$0xf]
    %v313 = vld [vmem:[#allocation8 + $0x30] sm:$0xf]
    %v314 = vld [vmem:[#allocation8 + $0x34] sm:$0xf]
    %v315 = vld [vmem:[#allocation8 + $0x38] sm:$0xf]
    %v316 = vld [vmem:[#allocation8 + $0x3c] sm:$0xf]
    %v317 = vunpack.c.l.bf16 %v301
    %v318 = vunpack.c.l.bf16 %v302
    %v319 = vunpack.c.l.bf16 %v303
    %v320 = vunpack.c.l.bf16 %v304
    %v321 = vunpack.c.l.bf16 %v305
    %v322 = vunpack.c.l.bf16 %v306
    %v323 = vunpack.c.l.bf16 %v307
    %v324 = vunpack.c.l.bf16 %v308
    %v325 = vunpack.c.l.bf16 %v309
    %v326 = vunpack.c.l.bf16 %v310
    %v327 = vunpack.c.l.bf16 %v311
    %v328 = vunpack.c.l.bf16 %v312
    %v329 = vunpack.c.l.bf16 %v313
    %v330 = vunpack.c.l.bf16 %v314
    %v331 = vunpack.c.l.bf16 %v315
    %v332 = vunpack.c.l.bf16 %v316
    %v333 = vld [vmem:[%s6] sm:$0x1]
    %v335 = vlaneseq
    %v336 = vshrl.u32 %v335, 7
    %v337 = vsub.s32 0, %v336
    %v338 = vrot.slane %v333, %v337
    %340 = vmatprep.subr.mxu0 0.0
    %341 = vmatpush1.msra.mxu0 %v332
    %342 = vmatprep.subr.mxu0 0.0
    %343 = vmatpush1.msra.mxu0 %v331
    %344 = vmatprep.subr.mxu0 0.0
    %345 = vmatpush1.msra.mxu0 %v330
    %346 = vmatprep.subr.mxu0 0.0
    %347 = vmatpush1.msra.mxu0 %v329
    %348 = vmatprep.subr.mxu0 0.0
    %349 = vmatpush1.msra.mxu0 %v328
    %350 = vmatprep.subr.mxu0 0.0
    %351 = vmatpush1.msra.mxu0 %v327
    %352 = vmatprep.subr.mxu0 0.0
    %353 = vmatpush1.msra.mxu0 %v326
    %354 = vmatprep.subr.mxu0 0.0
    %355 = vmatpush1.msra.mxu0 %v325
    %356 = vmatprep.subr.mxu0 0.0
    %357 = vmatpush1.msra.mxu0 %v324
    %358 = vmatprep.subr.mxu0 0.0
    %359 = vmatpush1.msra.mxu0 %v323
    %360 = vmatprep.subr.mxu0 0.0
    %361 = vmatpush1.msra.mxu0 %v322
    %362 = vmatprep.subr.mxu0 0.0
    %363 = vmatpush1.msra.mxu0 %v321
    %364 = vmatprep.subr.mxu0 0.0
    %365 = vmatpush1.msra.mxu0 %v320
    %366 = vmatprep.subr.mxu0 0.0
    %367 = vmatpush1.msra.mxu0 %v319
    %368 = vmatprep.subr.mxu0 0.0
    %369 = vmatpush1.msra.mxu0 %v318
    %370 = vmatprep.subr.mxu0 0.0
    %371 = vmatpush1.msra.mxu0 %v317
    %372 = vmatprep.subr.mxu0 0.0
    %373 = vmatpush2.msra.mxu0 0.0
    %374 = vmatprep.subr.mxu0 0.0
    %375 = vmatpush2.msra.mxu0 0.0
    %376 = vmatprep.subr.mxu0 0.0
    %377 = vmatpush2.msra.mxu0 0.0
    %378 = vmatprep.subr.mxu0 0.0
    %379 = vmatpush2.msra.mxu0 0.0
    %380 = vmatprep.subr.mxu0 0.0
    %381 = vmatpush2.msra.mxu0 0.0
    %382 = vmatprep.subr.mxu0 0.0
    %383 = vmatpush2.msra.mxu0 0.0
    %384 = vmatprep.subr.mxu0 0.0
    %385 = vmatpush2.msra.mxu0 0.0
    %386 = vmatprep.subr.mxu0 0.0
    %387 = vmatpush2.msra.mxu0 0.0
    %388 = vmatprep.subr.mxu0 0.0
    %389 = vmatpush2.msra.mxu0 0.0
    %390 = vmatprep.subr.mxu0 0.0
    %391 = vmatpush2.msra.mxu0 0.0
    %392 = vmatprep.subr.mxu0 0.0
    %393 = vmatpush2.msra.mxu0 0.0
    %394 = vmatprep.subr.mxu0 0.0
    %395 = vmatpush2.msra.mxu0 0.0
    %396 = vmatprep.subr.mxu0 0.0
    %397 = vmatpush2.msra.mxu0 0.0
    %398 = vmatprep.subr.mxu0 0.0
    %399 = vmatpush2.msra.mxu0 0.0
    %400 = vmatprep.subr.mxu0 0.0
    %401 = vmatpush2.msra.mxu0 0.0
    %402 = vmatprep.subr.mxu0 0.0
    %403 = vmatpush2.msra.mxu0 0.0
    %404 = vmatprep.mubr.f32.mxu0 0.0
    %405 = vmatmul.mubr.f32.gmra.mxu0 %v300
    %v406 = vpop.f32.mrf.mxu0
    %v407 = vadd.f32 %v338, %v406
    %v408 = vpop.f32.mrf.mxu0
    %409 = vdwg.mxu0
    %410 = vst [vmem:[#allocation10] sm:$0xff] %v407
    // Predicated region
    $region46: #{tpu_custom_call.1} parent=1 // pred_check
      _
    $region47: #{tpu_custom_call.1} parent=1 // pred_check_branch
      %412 = sbr.rel (0) target = $region49
    $region48: #{tpu_custom_call.1} parent=1 // pred_region
      %s414 = ssub.s32 128, 128
      %415 = vsyncadd [#allocation4], %s414
      %s417 = sshll.u32 [#allocation10], 4
      %s418 = int_to_ptr.vmem [resolvable:$true] %s417
      %420 = dma.vmem_to_hbm [thread:$0]  %s418, 128, %s7, [#allocation4]
    $region49: #{tpu_custom_call.1} parent=1 // pred_fallthru
      _
    // Predicated region
    $region50: #{tpu_custom_call.1} parent=1 // pred_check
      _
    $region51: #{tpu_custom_call.1} parent=1 // pred_check_branch
      %422 = sbr.rel (0) target = $region53
    $region52: #{tpu_custom_call.1} parent=1 // pred_region
      %423 = dma.done [#allocation4], 128
    $region53: #{tpu_custom_call.1} parent=1 // pred_fallthru
      _
    %424 = vsyncpa [#allocation3], 1
    %425 = vsyncpa [#allocation6], 1
    %426 = vsyncpa [#allocation9], 1
    %427 = vsyncpa [#allocation4], 1

</llo_original>
